<compile_context>
chip_gen: v7x
topology: tpu7x:2x2x1
jax: 0.10.0
libtpu: 0.0.40
codegen_flags: <defaults>
</compile_context>

<pallas_src>
import functools

import jax
import jax.numpy as jnp
from jax import lax
from jax.experimental import pallas as pl
from jax.experimental.pallas import tpu as pltpu


# ---------------------------------------------------------------------------
# VMEM budget (per generation, with headroom) and tiling helpers
# ---------------------------------------------------------------------------
_VMEM_LIMIT_CACHE = None


def _vmem_limit():
    """Scoped-VMEM budget: 75% of physical VMEM (48 MiB v7x, 96 MiB v5e/v6e)."""
    global _VMEM_LIMIT_CACHE
    if _VMEM_LIMIT_CACHE is None:
        cap = 128 * 1024 * 1024
        try:
            info = pltpu.get_tpu_info()
            cap = int(getattr(info, "vmem_capacity_bytes", cap))
        except Exception:
            pass
        _VMEM_LIMIT_CACHE = (cap * 3) // 4
    return _VMEM_LIMIT_CACHE


def _row_tile(dim, desired):
    """Tile for a row (second-to-last) dim.  Returns (tile, padded_dim).

    If dim <= desired the whole dim is one block (full-extent blocks are always
    legal).  Otherwise use `desired` (a multiple of 8) and zero-pad the dim up
    to a multiple of it -- no giant full-extent fallback blocks.
    """
    if dim <= desired:
        return dim, dim
    padded = ((dim + desired - 1) // desired) * desired
    return desired, padded


def _divisor_tile(dim, desired):
    """Largest divisor of dim that is <= desired (generic tiled fallback)."""
    if dim <= desired:
        return dim
    for t in range(desired, 0, -1):
        if dim % t == 0:
            return t
    return dim


def _pad_rows(x2d, padded_rows):
    rows = x2d.shape[0]
    if padded_rows == rows:
        return x2d
    return jnp.pad(x2d, ((0, padded_rows - rows), (0, 0)))


def _weight_resident(K, N, tm, itemsize):
    """Whole [K, N] weight + double-buffered x/out blocks fit the VMEM budget?"""
    need = K * N * itemsize + 2 * tm * (K + N) * itemsize + (1 << 20)
    return need < int(0.8 * _vmem_limit())


# ---------------------------------------------------------------------------
# 1) Fused LayerNorm + Q projection (weight-resident), plus unfused fallbacks
# ---------------------------------------------------------------------------
def _ln_qproj_kernel(x_ref, g_ref, b_ref, w_ref, o_ref, *, eps):
    x = x_ref[...].astype(jnp.float32)                    # [tm, D]
    mean = jnp.mean(x, axis=-1, keepdims=True)
    xc = x - mean
    var = jnp.mean(xc * xc, axis=-1, keepdims=True)
    xn = xc * lax.rsqrt(var + eps) * g_ref[...].astype(jnp.float32) \
        + b_ref[...].astype(jnp.float32)
    o_ref[...] = jnp.dot(xn.astype(w_ref.dtype), w_ref[...],
                         preferred_element_type=jnp.float32).astype(o_ref.dtype)


def _layernorm_kernel(x_ref, g_ref, b_ref, o_ref, *, eps):
    x = x_ref[...].astype(jnp.float32)
    mean = jnp.mean(x, axis=-1, keepdims=True)
    xc = x - mean
    var = jnp.mean(xc * xc, axis=-1, keepdims=True)
    y = xc * lax.rsqrt(var + eps) * g_ref[...].astype(jnp.float32) \
        + b_ref[...].astype(jnp.float32)
    o_ref[...] = y.astype(o_ref.dtype)


def layernorm(x2d, gamma, beta, *, eps=1e-5, tm=512):
    M, D = x2d.shape
    tm, Mp = _row_tile(M, tm)
    xp = _pad_rows(x2d, Mp)
    y = pl.pallas_call(
        functools.partial(_layernorm_kernel, eps=eps),
        out_shape=jax.ShapeDtypeStruct((Mp, D), x2d.dtype),
        grid_spec=pltpu.PrefetchScalarGridSpec(
            num_scalar_prefetch=0,
            grid=(Mp // tm,),
            in_specs=[
                pl.BlockSpec((tm, D), lambda i: (i, 0)),
                pl.BlockSpec((1, D), lambda i: (0, 0)),
                pl.BlockSpec((1, D), lambda i: (0, 0)),
            ],
            out_specs=pl.BlockSpec((tm, D), lambda i: (i, 0)),
        ),
        compiler_params=pltpu.CompilerParams(
            dimension_semantics=("parallel",),
            vmem_limit_bytes=_vmem_limit(),
        ),
    )(xp, gamma.reshape(1, D), beta.reshape(1, D))
    return y[:M] if Mp != M else y


def layernorm_qproj(x2d, gamma, beta, wq_t, *, eps=1e-5, tm=512):
    """LayerNorm(x2d) @ wq_t  with the weight held resident in VMEM."""
    M, D = x2d.shape
    Nq = wq_t.shape[1]
    itemsize = jnp.dtype(x2d.dtype).itemsize
    tm, Mp = _row_tile(M, tm)
    if not _weight_resident(D, Nq, tm, itemsize):
        # TODO(synk): very large D*inner_dim; fall back to unfused LN + tiled GEMM.
        return linear_wt(layernorm(x2d, gamma, beta, eps=eps), wq_t)
    xp = _pad_rows(x2d, Mp)
    y = pl.pallas_call(
        functools.partial(_ln_qproj_kernel, eps=eps),
        out_shape=jax.ShapeDtypeStruct((Mp, Nq), x2d.dtype),
        grid_spec=pltpu.PrefetchScalarGridSpec(
            num_scalar_prefetch=0,
            grid=(Mp // tm,),
            in_specs=[
                pl.BlockSpec((tm, D), lambda i: (i, 0)),
                pl.BlockSpec((1, D), lambda i: (0, 0)),
                pl.BlockSpec((1, D), lambda i: (0, 0)),
                pl.BlockSpec((D, Nq), lambda i: (0, 0)),   # resident weight
            ],
            out_specs=pl.BlockSpec((tm, Nq), lambda i: (i, 0)),
        ),
        compiler_params=pltpu.CompilerParams(
            dimension_semantics=("parallel",),
            vmem_limit_bytes=_vmem_limit(),
        ),
    )(xp, gamma.reshape(1, D), beta.reshape(1, D), wq_t)
    return y[:M] if Mp != M else y


# ---------------------------------------------------------------------------
# 2) Projections: weight-resident linear + dual-output KV projection
# ---------------------------------------------------------------------------
def _linear_resident_kernel(x_ref, w_ref, o_ref):
    o_ref[...] = jnp.dot(x_ref[...], w_ref[...],
                         preferred_element_type=jnp.float32).astype(o_ref.dtype)


def _matmul_kernel(x_ref, w_ref, o_ref, acc_ref):
    @pl.when(pl.program_id(2) == 0)
    def _():
        acc_ref[...] = jnp.zeros_like(acc_ref)

    acc_ref[...] += jnp.dot(x_ref[...], w_ref[...],
                            preferred_element_type=jnp.float32)

    @pl.when(pl.program_id(2) == pl.num_programs(2) - 1)
    def _():
        o_ref[...] = acc_ref[...].astype(o_ref.dtype)


def linear_wt(x2d, w_t, *, tm=512, tn=512, tk=512):
    """y = x2d @ w_t, with w_t already in [K, N] layout."""
    M, K = x2d.shape
    K2, N = w_t.shape
    assert K == K2
    itemsize = jnp.dtype(x2d.dtype).itemsize
    tm, Mp = _row_tile(M, tm)
    xp = _pad_rows(x2d, Mp)

    if _weight_resident(K, N, tm, itemsize):
        y = pl.pallas_call(
            _linear_resident_kernel,
            out_shape=jax.ShapeDtypeStruct((Mp, N), x2d.dtype),
            grid_spec=pltpu.PrefetchScalarGridSpec(
                num_scalar_prefetch=0,
                grid=(Mp // tm,),
                in_specs=[
                    pl.BlockSpec((tm, K), lambda i: (i, 0)),
                    pl.BlockSpec((K, N), lambda i: (0, 0)),   # resident weight
                ],
                out_specs=pl.BlockSpec((tm, N), lambda i: (i, 0)),
            ),
            compiler_params=pltpu.CompilerParams(
                dimension_semantics=("parallel",),
                vmem_limit_bytes=_vmem_limit(),
            ),
        )(xp, w_t)
    else:
        # Generic tiled path for weights too large to hold resident.
        # TODO(synk): pad ragged N/K instead of divisor-search tiles.
        tn2 = _divisor_tile(N, tn)
        tk2 = _divisor_tile(K, tk)
        y = pl.pallas_call(
            _matmul_kernel,
            out_shape=jax.ShapeDtypeStruct((Mp, N), x2d.dtype),
            grid_spec=pltpu.PrefetchScalarGridSpec(
                num_scalar_prefetch=0,
                grid=(Mp // tm, N // tn2, K // tk2),
                in_specs=[
                    pl.BlockSpec((tm, tk2), lambda i, j, k: (i, k)),
                    pl.BlockSpec((tk2, tn2), lambda i, j, k: (k, j)),
                ],
                out_specs=pl.BlockSpec((tm, tn2), lambda i, j, k: (i, j)),
                scratch_shapes=[pltpu.VMEM((tm, tn2), jnp.float32)],
            ),
            compiler_params=pltpu.CompilerParams(
                dimension_semantics=("parallel", "parallel", "arbitrary"),
                vmem_limit_bytes=_vmem_limit(),
            ),
        )(xp, w_t)
    return y[:M] if Mp != M else y


def _kv_proj_kernel(c_ref, wk_ref, wv_ref, k_ref, v_ref):
    c = c_ref[...]
    k_ref[...] = jnp.dot(c, wk_ref[...],
                         preferred_element_type=jnp.float32).astype(k_ref.dtype)
    v_ref[...] = jnp.dot(c, wv_ref[...],
                         preferred_element_type=jnp.float32).astype(v_ref.dtype)


def kv_proj(c2d, wk_t, wv_t, *, tm=512):
    """K = c2d @ wk_t, V = c2d @ wv_t in one pass over context (no runtime slice)."""
    M, Dc = c2d.shape
    DH = wk_t.shape[1]
    tm, Mp = _row_tile(M, tm)
    cp = _pad_rows(c2d, Mp)
    k2d, v2d = pl.pallas_call(
        _kv_proj_kernel,
        out_shape=(jax.ShapeDtypeStruct((Mp, DH), c2d.dtype),
                   jax.ShapeDtypeStruct((Mp, DH), c2d.dtype)),
        grid_spec=pltpu.PrefetchScalarGridSpec(
            num_scalar_prefetch=0,
            grid=(Mp // tm,),
            in_specs=[
                pl.BlockSpec((tm, Dc), lambda i: (i, 0)),
                pl.BlockSpec((Dc, DH), lambda i: (0, 0)),
                pl.BlockSpec((Dc, DH), lambda i: (0, 0)),
            ],
            out_specs=[pl.BlockSpec((tm, DH), lambda i: (i, 0)),
                       pl.BlockSpec((tm, DH), lambda i: (i, 0))],
        ),
        compiler_params=pltpu.CompilerParams(
            dimension_semantics=("parallel",),
            vmem_limit_bytes=_vmem_limit(),
        ),
    )(cp, wk_t, wv_t)
    if Mp != M:
        k2d, v2d = k2d[:M], v2d[:M]
    return k2d, v2d


# ---------------------------------------------------------------------------
# 3) Flash cross-attention: all heads per block, online softmax over KV tiles.
#    Q is head-minor [B, N, H*DH]; K/V/mask are loaded once per (b, q, kv) tile
#    and reused across all heads (the softmax scale is pre-folded into Wq).
# ---------------------------------------------------------------------------
def _flash_cross_attn_kernel(q_ref, k_ref, v_ref, mask_ref, o_ref,
                             m_sc, l_sc, acc_sc, *, heads, dim_head):
    kv_i = pl.program_id(2)

    @pl.when(kv_i == 0)
    def _():
        m_sc[...] = jnp.full(m_sc.shape, -1e30, dtype=jnp.float32)
        l_sc[...] = jnp.zeros(l_sc.shape, dtype=jnp.float32)
        acc_sc[...] = jnp.zeros(acc_sc.shape, dtype=jnp.float32)

    k = k_ref[...]                                    # [tkv, DH] — shared by all heads
    v = v_ref[...]                                    # [tkv, DH]
    mask = mask_ref[...].astype(jnp.float32)          # [tq, tkv]  — shared by all heads

    for h in range(heads):                            # static unroll
        cols = slice(h * dim_head, (h + 1) * dim_head)
        hc = slice(h, h + 1)
        q_h = q_ref[:, cols]                          # [tq, DH] (scale folded into Wq)
        s = lax.dot_general(q_h, k, (((1,), (1,)), ((), ())),
                            preferred_element_type=jnp.float32)
        s = s + mask
        m_prev = m_sc[:, hc]
        m_new = jnp.maximum(m_prev, jnp.max(s, axis=-1, keepdims=True))
        alpha = jnp.exp(m_prev - m_new)
        p = jnp.exp(s - m_new)
        l_sc[:, hc] = alpha * l_sc[:, hc] + jnp.sum(p, axis=-1, keepdims=True)
        acc_sc[:, cols] = alpha * acc_sc[:, cols] + jnp.dot(
            p.astype(v.dtype), v, preferred_element_type=jnp.float32)
        m_sc[:, hc] = m_new

    @pl.when(kv_i == pl.num_programs(2) - 1)
    def _():
        l = l_sc[...]                                  # [tq, H]
        # Guard fully-masked rows (l == 0) so the finalize never divides by 0.
        inv = pl.reciprocal(jnp.where(l > 0.0, l, 1.0), approx=True)
        for h in range(heads):
            cols = slice(h * dim_head, (h + 1) * dim_head)
            o_ref[:, cols] = (acc_sc[:, cols] * inv[:, h:h + 1]).astype(o_ref.dtype)


def flash_cross_attention(q, k, v, mask, *, heads, dim_head, tq=256, tkv=512):
    """q: [B, N, H*DH] (head-minor), k/v: [B, M, DH], mask: [B, N, M] additive."""
    B, N, HDH = q.shape
    Mc = k.shape[1]
    tq, Np = _row_tile(N, tq)
    tkv, Mcp = _row_tile(Mc, tkv)
    if Np != N:
        q = jnp.pad(q, ((0, 0), (0, Np - N), (0, 0)))
        mask = jnp.pad(mask, ((0, 0), (0, Np - N), (0, 0)))
    if Mcp != Mc:
        k = jnp.pad(k, ((0, 0), (0, Mcp - Mc), (0, 0)))
        v = jnp.pad(v, ((0, 0), (0, Mcp - Mc), (0, 0)))
        # Padded KV columns get a large negative logit -> zero attention weight.
        mask = jnp.pad(mask, ((0, 0), (0, 0), (0, Mcp - Mc)), constant_values=-1e30)

    out = pl.pallas_call(
        functools.partial(_flash_cross_attn_kernel, heads=heads, dim_head=dim_head),
        out_shape=jax.ShapeDtypeStruct((B, Np, HDH), q.dtype),
        grid_spec=pltpu.PrefetchScalarGridSpec(
            num_scalar_prefetch=0,
            grid=(B, Np // tq, Mcp // tkv),
            in_specs=[
                pl.BlockSpec((None, tq, HDH), lambda b, i, j: (b, i, 0)),
                # TODO(synk): pipeline_mode=pl.Buffered(3) on K/V/mask if profiling
                # shows exposed DMA in the kv loop on v6e/v7x.
                pl.BlockSpec((None, tkv, dim_head), lambda b, i, j: (b, j, 0)),
                pl.BlockSpec((None, tkv, dim_head), lambda b, i, j: (b, j, 0)),
                pl.BlockSpec((None, tq, tkv), lambda b, i, j: (b, i, j)),
            ],
            out_specs=pl.BlockSpec((None, tq, HDH), lambda b, i, j: (b, i, 0)),
            scratch_shapes=[
                pltpu.VMEM((tq, heads), jnp.float32),            # running max
                pltpu.VMEM((tq, heads), jnp.float32),            # running denominator
                pltpu.VMEM((tq, heads * dim_head), jnp.float32),  # output accumulator
            ],
        ),
        compiler_params=pltpu.CompilerParams(
            dimension_semantics=("parallel", "parallel", "arbitrary"),
            vmem_limit_bytes=_vmem_limit(),
        ),
    )(q, k, v, mask)
    return out[:, :N, :] if Np != N else out


# ---------------------------------------------------------------------------
# Full CrossAttention forward (norm_context=False, parallel_ff=False defaults)
# ---------------------------------------------------------------------------
def cross_attention_forward(x, context, mask, params, *, heads, dim_head, eps=1e-5):
    B, N, D = x.shape
    Mc, Dc = context.shape[1], context.shape[2]
    inner = heads * dim_head
    scale = float(dim_head) ** -0.5

    # Trace-time weight plumbing (free): fold softmax scale into Wq, split Wkv,
    # and move everything to the [K, N] "x @ W" layout the kernels consume.
    wq_t = (params["wq"] * scale).T                    # [D, inner]
    wk_t = params["wkv"][:dim_head].T                  # [Dc, DH]
    wv_t = params["wkv"][dim_head:].T                  # [Dc, DH]
    wo_t = params["wo"].T                              # [inner, D]

    # 1+2a) Fused LayerNorm(x) + Q projection; Q stays head-minor [B, N, H*DH].
    q2d = layernorm_qproj(x.reshape(B * N, D), params["norm_w"], params["norm_b"],
                          wq_t, eps=eps)
    q = q2d.reshape(B, N, inner)

    # 2b) K/V projections in one pass over context (K/V shared across heads).
    k2d, v2d = kv_proj(context.reshape(B * Mc, Dc), wk_t, wv_t)
    k = k2d.reshape(B, Mc, dim_head)
    v = v2d.reshape(B, Mc, dim_head)

    # 3) flash attention with additive mask; output is head-minor [B, N, H*DH].
    out_h = flash_cross_attention(q, k, v, mask, heads=heads, dim_head=dim_head)

    # 4) output projection (no transposes needed anywhere).
    out = linear_wt(out_h.reshape(B * N, inner), wo_t)
    # TODO(synk): parallel_ff SwiGLU branch not implemented (module default
    # parallel_ff=False -> self.ff is None, so forward semantics are unchanged).
    return out.reshape(B, N, D)


# ---------------------------------------------------------------------------
# Pure-JAX reference (mirrors the PyTorch forward exactly)
# ---------------------------------------------------------------------------
def reference_forward(x, context, mask, params, *, heads, dim_head, eps=1e-5):
    mean = x.mean(-1, keepdims=True)
    var = ((x - mean) ** 2).mean(-1, keepdims=True)
    xn = (x - mean) / jnp.sqrt(var + eps) * params["norm_w"] + params["norm_b"]
    q = xn @ params["wq"].T
    b, n, _ = q.shape
    q = q.reshape(b, n, heads, dim_head).transpose(0, 2, 1, 3) * (dim_head ** -0.5)
    kv = context @ params["wkv"].T
    k, v = kv[..., :dim_head], kv[..., dim_head:]
    sim = jnp.einsum("bhid,bjd->bhij", q, k) + mask[:, None, :, :]
    sim = sim - sim.max(axis=-1, keepdims=True)
    attn = jax.nn.softmax(sim, axis=-1)
    out = jnp.einsum("bhij,bjd->bhid", attn, v)
    out = out.transpose(0, 2, 1, 3).reshape(b, n, heads * dim_head)
    return out @ params["wo"].T


if __name__ == "__main__":
    key = jax.random.PRNGKey(0)
    keys = jax.random.split(key, 8)

    batch, seq_q, seq_kv = 2, 8, 16
    dim, heads, dim_head = 32, 2, 16
    inner_dim = heads * dim_head

    x = jax.random.normal(keys[0], (batch, seq_q, dim), dtype=jnp.float32)
    context = jax.random.normal(keys[1], (batch, seq_kv, dim), dtype=jnp.float32)
    # Additive attention mask [b, i, j] as in the PyTorch forward.
    mask = jax.random.normal(keys[2], (batch, seq_q, seq_kv), dtype=jnp.float32)

    params = {
        "norm_w": 1.0 + 0.1 * jax.random.normal(keys[3], (dim,), dtype=jnp.float32),
        "norm_b": 0.1 * jax.random.normal(keys[4], (dim,), dtype=jnp.float32),
        # PyTorch nn.Linear convention: weight is [out_features, in_features].
        "wq": jax.random.normal(keys[5], (inner_dim, dim), dtype=jnp.float32) / jnp.sqrt(dim),
        "wkv": jax.random.normal(keys[6], (2 * dim_head, dim), dtype=jnp.float32) / jnp.sqrt(dim),
        "wo": jax.random.normal(keys[7], (dim, inner_dim), dtype=jnp.float32) / jnp.sqrt(inner_dim),
    }

    out = cross_attention_forward(x, context, mask, params,
                                  heads=heads, dim_head=dim_head)
    out = jax.block_until_ready(out)

    ref = reference_forward(x, context, mask, params,
                            heads=heads, dim_head=dim_head)

    assert out.shape == (batch, seq_q, dim)
    # Tolerance covers TPU default-precision (bf16-pass) f32 MXU matmuls and the
    # approx EUP reciprocal in the softmax finalize.
    max_diff = jnp.max(jnp.abs(out - ref))
    assert jnp.allclose(out, ref, atol=2e-2, rtol=2e-2), (
        f"mismatch vs reference, max abs diff = {max_diff}")
    print("KERNEL_OK")
</pallas_src>

<mosaic_0001>
module attributes {stable_mosaic.version = 11 : i64} {
  func.func @_ln_qproj_kernel(%arg0: i32, %arg1: memref<16x32xf32, #tpu.memory_space<vmem>>, %arg2: memref<1x32xf32, #tpu.memory_space<vmem>>, %arg3: memref<1x32xf32, #tpu.memory_space<vmem>>, %arg4: memref<32x32xf32, #tpu.memory_space<vmem>>, %arg5: memref<16x32xf32, #tpu.memory_space<vmem>>) attributes {dimension_semantics = [#tpu.dimension_semantics<parallel>], iteration_bounds = array<i64: 1>, scalar_prefetch = 0 : i64, scratch_operands = 0 : i64, tpu.core_type = #tpu.core_type<tc>, window_params = [{transform_indices = @transform_0, window_bounds = array<i64: 16, 32>}, {pipeline_mode = #tpu.pipeline_mode<synchronous>, transform_indices = @transform_1, window_bounds = array<i64: 1, 32>}, {pipeline_mode = #tpu.pipeline_mode<synchronous>, transform_indices = @transform_2, window_bounds = array<i64: 1, 32>}, {pipeline_mode = #tpu.pipeline_mode<synchronous>, transform_indices = @transform_3, window_bounds = array<i64: 32, 32>}, {transform_indices = @transform_4, window_bounds = array<i64: 16, 32>}]} {
    %c0 = arith.constant 0 : index
    %c0_0 = arith.constant 0 : index
    %0 = vector.load %arg1[%c0, %c0_0] : memref<16x32xf32, #tpu.memory_space<vmem>>, vector<16x32xf32>
    %cst = arith.constant dense<0.000000e+00> : vector<16xf32>
    %1 = vector.multi_reduction <add>, %0, %cst [1] : vector<16x32xf32> to vector<16xf32>
    %2 = vector.shape_cast %1 : vector<16xf32> to vector<16x1xf32>
    %cst_1 = arith.constant 3.200000e+01 : f32
    %3 = vector.broadcast %cst_1 : f32 to vector<16x1xf32>
    %4 = arith.divf %2, %3 : vector<16x1xf32>
    %5 = vector.broadcast %4 : vector<16x1xf32> to vector<16x32xf32>
    %6 = arith.subf %0, %5 : vector<16x32xf32>
    %7 = arith.mulf %6, %6 : vector<16x32xf32>
    %cst_2 = arith.constant dense<0.000000e+00> : vector<16xf32>
    %8 = vector.multi_reduction <add>, %7, %cst_2 [1] : vector<16x32xf32> to vector<16xf32>
    %9 = vector.shape_cast %8 : vector<16xf32> to vector<16x1xf32>
    %cst_3 = arith.constant 3.200000e+01 : f32
    %10 = vector.broadcast %cst_3 : f32 to vector<16x1xf32>
    %11 = arith.divf %9, %10 : vector<16x1xf32>
    %cst_4 = arith.constant 9.99999974E-6 : f32
    %12 = vector.broadcast %cst_4 : f32 to vector<16x1xf32>
    %13 = arith.addf %11, %12 : vector<16x1xf32>
    %14 = math.rsqrt %13 : vector<16x1xf32>
    %15 = vector.broadcast %14 : vector<16x1xf32> to vector<16x32xf32>
    %16 = arith.mulf %6, %15 : vector<16x32xf32>
    %c0_5 = arith.constant 0 : index
    %c0_6 = arith.constant 0 : index
    %17 = vector.load %arg2[%c0_5, %c0_6] : memref<1x32xf32, #tpu.memory_space<vmem>>, vector<1x32xf32>
    %18 = vector.broadcast %17 : vector<1x32xf32> to vector<16x32xf32>
    %19 = arith.mulf %16, %18 : vector<16x32xf32>
    %c0_7 = arith.constant 0 : index
    %c0_8 = arith.constant 0 : index
    %20 = vector.load %arg3[%c0_7, %c0_8] : memref<1x32xf32, #tpu.memory_space<vmem>>, vector<1x32xf32>
    %21 = vector.broadcast %20 : vector<1x32xf32> to vector<16x32xf32>
    %22 = arith.addf %19, %21 : vector<16x32xf32>
    %c0_9 = arith.constant 0 : index
    %c0_10 = arith.constant 0 : index
    %23 = vector.load %arg4[%c0_9, %c0_10] : memref<32x32xf32, #tpu.memory_space<vmem>>, vector<32x32xf32>
    %cst_11 = arith.constant dense<0.000000e+00> : vector<16x32xf32>
    %24 = tpu.matmul %22, %23, %cst_11 {dimension_numbers = #tpu.dot_dimension_numbers<[1], [0], [0], [1], [0, 0, 1, 1], [], []>} : vector<16x32xf32>, vector<32x32xf32>, vector<16x32xf32> -> vector<16x32xf32>
    %c0_12 = arith.constant 0 : index
    %c0_13 = arith.constant 0 : index
    %25 = vector.load %arg5[%c0_12, %c0_13] : memref<16x32xf32, #tpu.memory_space<vmem>>, vector<16x32xf32>
    tpu.vector_store %arg5[%c0_12, %c0_13], %24 {strides = array<i32>} : memref<16x32xf32, #tpu.memory_space<vmem>>, vector<16x32xf32>,
    return
  }
  func.func @transform_0(%arg0: i32) -> (i32, i32) {
    %c0_i32 = arith.constant 0 : i32
    %c0_i32_0 = arith.constant 0 : i32
    return %arg0, %c0_i32 : i32, i32
  }
  func.func @transform_1(%arg0: i32) -> (i32, i32) {
    %c0_i32 = arith.constant 0 : i32
    %c0_i32_0 = arith.constant 0 : i32
    %c0_i32_1 = arith.constant 0 : i32
    return %c0_i32, %c0_i32_0 : i32, i32
  }
  func.func @transform_2(%arg0: i32) -> (i32, i32) {
    %c0_i32 = arith.constant 0 : i32
    %c0_i32_0 = arith.constant 0 : i32
    %c0_i32_1 = arith.constant 0 : i32
    return %c0_i32, %c0_i32_0 : i32, i32
  }
  func.func @transform_3(%arg0: i32) -> (i32, i32) {
    %c0_i32 = arith.constant 0 : i32
    %c0_i32_0 = arith.constant 0 : i32
    %c0_i32_1 = arith.constant 0 : i32
    return %c0_i32, %c0_i32_0 : i32, i32
  }
  func.func @transform_4(%arg0: i32) -> (i32, i32) {
    %c0_i32 = arith.constant 0 : i32
    %c0_i32_0 = arith.constant 0 : i32
    return %arg0, %c0_i32 : i32, i32
  }
}

</mosaic_0001>

<llo_original>
// kernel: tpu_custom_call.1
$region0: #{tpu_custom_call.1}
  #allocation0 [shape = 'u32[]', space=smem, size = 0x4, offset = 0x4, fixed_abs, tag = 'smem constant byte address 0x4 - core index']
  #allocation1 [shape = 'u32[144,128]{1,0:T(1,128)}', space=vmem, size = 0x12000, scoped, tag = 'internal scratch']
  %s0 = inlined_call_operand.hbm [shape: f32[16,32], index: 0, kind: input, shape index: {}]
  %s1 = inlined_call_operand.hbm [shape: f32[1,32], index: 1, kind: input, shape index: {}]
  %s2 = inlined_call_operand.hbm [shape: f32[1,32], index: 2, kind: input, shape index: {}]
  %s3 = inlined_call_operand.hbm [shape: f32[32,32], index: 3, kind: input, shape index: {}]
  %s4 = inlined_call_operand.hbm [shape: f32[16,32], index: 4, kind: output, shape index: {}]
  %s5 = sld [smem:[#allocation0]]
  $region42: #{tpu_custom_call.1} parent=0
    _
  %s7 = ssub.s32 1, %s5
  %s8 = scalar_select 0, %s7, %s5
  $region1: #{tpu_custom_call.1} parent=0
    #allocation2 [shape = 'u8[8192]{0}', space=vmem, size = 0x2000, scoped, tag = 'input window, operand 0, single buffered']
    #allocation3 [shape = 's32[1]{0}', space=sflag, size = 0x4, scoped, tag = 'scoped memory for tpu_custom_call.1']
    #allocation4 [shape = 's32[1]{0}', space=sflag, size = 0x4, scoped, tag = 'scoped memory for tpu_custom_call.1']
    #allocation5 [shape = 'u8[512]{0}', space=vmem, size = 0x400, scoped, tag = 'input window, operand 1, single buffered']
    #allocation6 [shape = 's32[1]{0}', space=sflag, size = 0x4, scoped, tag = 'scoped memory for tpu_custom_call.1']
    #allocation7 [shape = 'u8[512]{0}', space=vmem, size = 0x400, scoped, tag = 'input window, operand 2, single buffered']
    #allocation8 [shape = 'u8[16384]{0}', space=vmem, size = 0x4000, scoped, tag = 'input window, operand 3, single buffered']
    #allocation9 [shape = 's32[1]{0}', space=sflag, size = 0x4, scoped, tag = 'scoped memory for tpu_custom_call.1']
    #allocation10 [shape = 'u8[8192]{0}', space=vmem, size = 0x2000, scoped, tag = 'output window, operand 0, single buffered']
    %9 = vsyncpa [#allocation3], 0
    %10 = vsyncpa [#allocation6], 0
    %11 = vsyncpa [#allocation9], 0
    %12 = vsyncpa [#allocation4], 0
    // Predicated region
    $region2: #{tpu_custom_call.1} parent=1 // pred_check
      _
    $region3: #{tpu_custom_call.1} parent=1 // pred_check_branch
      %14 = sbr.rel (0) target = $region5
    $region4: #{tpu_custom_call.1} parent=1 // pred_region
      %s16 = ssub.s32 256, 256
      %17 = vsyncadd [#allocation3], %s16
      %s18 = sshll.u32 [#allocation2], 4
      %s19 = int_to_ptr.vmem [resolvable:$true] %s18
      %24 = dma.hbm_to_vmem [thread:$0]  %s0, 256, %s19, [#allocation3], 128, 128, 8
    $region5: #{tpu_custom_call.1} parent=1 // pred_fallthru
      _
    // Predicated region
    $region6: #{tpu_custom_call.1} parent=1 // pred_check
      _
    $region7: #{tpu_custom_call.1} parent=1 // pred_check_branch
      %26 = sbr.rel (0) target = $region9
    $region8: #{tpu_custom_call.1} parent=1 // pred_region
      %s28 = ssub.s32 16, 16
      %29 = vsyncadd [#allocation6], %s28
      %s31 = sshll.u32 [#allocation5], 4
      %s32 = int_to_ptr.vmem [resolvable:$true] %s31
      %34 = dma.hbm_to_vmem [thread:$0]  %s1, 16, %s32, [#allocation6]
    $region9: #{tpu_custom_call.1} parent=1 // pred_fallthru
      _
    // Predicated region
    $region10: #{tpu_custom_call.1} parent=1 // pred_check
      _
    $region11: #{tpu_custom_call.1} parent=1 // pred_check_branch
      %36 = sbr.rel (0) target = $region13
    $region12: #{tpu_custom_call.1} parent=1 // pred_region
      %s38 = ssub.s32 16, 16
      %39 = vsyncadd [#allocation6], %s38
      %s41 = sshll.u32 [#allocation7], 4
      %s42 = int_to_ptr.vmem [resolvable:$true] %s41
      %44 = dma.hbm_to_vmem [thread:$0]  %s2, 16, %s42, [#allocation6]
    $region13: #{tpu_custom_call.1} parent=1 // pred_fallthru
      _
    // Predicated region
    $region14: #{tpu_custom_call.1} parent=1 // pred_check
      _
    $region15: #{tpu_custom_call.1} parent=1 // pred_check_branch
      %46 = sbr.rel (0) target = $region17
    $region16: #{tpu_custom_call.1} parent=1 // pred_region
      %s48 = ssub.s32 512, 512
      %49 = vsyncadd [#allocation9], %s48
      %s50 = sshll.u32 [#allocation8], 4
      %s51 = int_to_ptr.vmem [resolvable:$true] %s50
      %56 = dma.hbm_to_vmem [thread:$0]  %s3, 512, %s51, [#allocation9], 128, 128, 8
    $region17: #{tpu_custom_call.1} parent=1 // pred_fallthru
      _
    // Predicated region
    $region18: #{tpu_custom_call.1} parent=1 // pred_check
      _
    $region19: #{tpu_custom_call.1} parent=1 // pred_check_branch
      %58 = sbr.rel (0) target = $region21
    $region20: #{tpu_custom_call.1} parent=1 // pred_region
      %59 = dma.done [#allocation3], 256
    $region21: #{tpu_custom_call.1} parent=1 // pred_fallthru
      _
    // Predicated region
    $region22: #{tpu_custom_call.1} parent=1 // pred_check
      _
    $region23: #{tpu_custom_call.1} parent=1 // pred_check_branch
      %61 = sbr.rel (0) target = $region25
    $region24: #{tpu_custom_call.1} parent=1 // pred_region
      %62 = dma.done [#allocation6], 16
    $region25: #{tpu_custom_call.1} parent=1 // pred_fallthru
      _
    // Predicated region
    $region26: #{tpu_custom_call.1} parent=1 // pred_check
      _
    $region27: #{tpu_custom_call.1} parent=1 // pred_check_branch
      %64 = sbr.rel (0) target = $region29
    $region28: #{tpu_custom_call.1} parent=1 // pred_region
      %65 = dma.done [#allocation6], 16
    $region29: #{tpu_custom_call.1} parent=1 // pred_fallthru
      _
    // Predicated region
    $region30: #{tpu_custom_call.1} parent=1 // pred_check
      _
    $region31: #{tpu_custom_call.1} parent=1 // pred_check_branch
      %67 = sbr.rel (0) target = $region33
    $region32: #{tpu_custom_call.1} parent=1 // pred_region
      %68 = dma.done [#allocation9], 512
    $region33: #{tpu_custom_call.1} parent=1 // pred_fallthru
      _
    %v69 = vld [vmem:[#allocation2] sm:$0xff]
    %v70 = vld [vmem:[#allocation2 + $0x8] sm:$0xff]
    %vm71 = vcmask 261120
    %v72 = vsel %vm71, %v69, 0.0
    %73 = vadd.xlane.f32.xlu0 %v72
    %v74 = vpop.xlane.xlu0 %73
    %v75 = vsel %vm71, %v70, 0.0
    %76 = vadd.xlane.f32.xlu0 %v75
    %v77 = vpop.xlane.xlu0 %76
    %v78 = vrcp.pop 32.0
    %v79 = vmul.f32 %v74, %v78
    %v80 = vmul.f32 %v77, %v78
    %v81 = vsub.f32 %v69, %v79
    %v82 = vsub.f32 %v70, %v80
    %v83 = vmul.f32 %v81, %v81
    %v84 = vmul.f32 %v82, %v82
    %v85 = vsel %vm71, %v83, 0.0
    %86 = vadd.xlane.f32.xlu0 %v85
    %v87 = vpop.xlane.xlu0 %86
    %v88 = vsel %vm71, %v84, 0.0
    %89 = vadd.xlane.f32.xlu0 %v88
    %v90 = vpop.xlane.xlu0 %89
    %v91 = vmul.f32 %v87, %v78
    %v92 = vmul.f32 %v90, %v78
    %v93 = vadd.f32 %v91, 1e-05
    %v94 = vadd.f32 %v92, 1e-05
    %v95 = vrsqrt.pop %v93
    %v96 = vrsqrt.pop %v94
    %v97 = vmul.f32 %v81, %v95
    %v98 = vmul.f32 %v82, %v96
    %v99 = vld [vmem:[#allocation5] sm:$0x1]
    %v101 = vlaneseq
    %v102 = vshrl.u32 %v101, 7
    %v103 = vsub.s32 0, %v102
    %v104 = vrot.slane %v99, %v103
    %v106 = vmul.f32 %v97, %v104
    %v107 = vmul.f32 %v98, %v104
    %v108 = vld [vmem:[#allocation7] sm:$0x1]
    %v110 = vlaneseq
    %v111 = vshrl.u32 %v110, 7
    %v112 = vsub.s32 0, %v111
    %v113 = vrot.slane %v108, %v112
    %v115 = vadd.f32 %v106, %v113
    %v116 = vadd.f32 %v107, %v113
    %v117 = vld [vmem:[#allocation8] sm:$0xff]
    %v118 = vld [vmem:[#allocation8 + $0x8] sm:$0xff]
    %v119 = vld [vmem:[#allocation8 + $0x10] sm:$0xff]
    %v120 = vld [vmem:[#allocation8 + $0x18] sm:$0xff]
    %v122 = vsel %vm71, %v115, 0
    %v125 = vsel %vm71, %v116, 0
    %127 = vmatprep.subr.mxu0 0.0
    %128 = vmatpush1.msra.mxu0 %v117
    %129 = vmatprep.subr.mxu0 0.0
    %130 = vmatpush1.msra.mxu0 %v118
    %131 = vmatprep.subr.mxu0 0.0
    %132 = vmatpush1.msra.mxu0 %v119
    %133 = vmatprep.subr.mxu0 0.0
    %134 = vmatpush1.msra.mxu0 %v120
    %135 = vmatprep.subr.mxu0 0.0
    %136 = vmatpush1.msra.mxu0 0.0
    %137 = vmatprep.subr.mxu0 0.0
    %138 = vmatpush1.msra.mxu0 0.0
    %139 = vmatprep.subr.mxu0 0.0
    %140 = vmatpush1.msra.mxu0 0.0
    %141 = vmatprep.subr.mxu0 0.0
    %142 = vmatpush1.msra.mxu0 0.0
    %143 = vmatprep.subr.mxu0 0.0
    %144 = vmatpush1.msra.mxu0 0.0
    %145 = vmatprep.subr.mxu0 0.0
    %146 = vmatpush1.msra.mxu0 0.0
    %147 = vmatprep.subr.mxu0 0.0
    %148 = vmatpush1.msra.mxu0 0.0
    %149 = vmatprep.subr.mxu0 0.0
    %150 = vmatpush1.msra.mxu0 0.0
    %151 = vmatprep.subr.mxu0 0.0
    %152 = vmatpush1.msra.mxu0 0.0
    %153 = vmatprep.subr.mxu0 0.0
    %154 = vmatpush1.msra.mxu0 0.0
    %155 = vmatprep.subr.mxu0 0.0
    %156 = vmatpush1.msra.mxu0 0.0
    %157 = vmatprep.subr.mxu0 0.0
    %158 = vmatpush1.msra.mxu0 0.0
    %159 = vmatprep.subr.mxu0 0.0
    %160 = vmatpush1.msra.mxu0 0.0
    %161 = vmatprep.subr.mxu0 0.0
    %162 = vmatpush1.msra.mxu0 0.0
    %163 = vmatprep.subr.mxu0 0.0
    %164 = vmatpush1.msra.mxu0 0.0
    %165 = vmatprep.subr.mxu0 0.0
    %166 = vmatpush1.msra.mxu0 0.0
    %167 = vmatprep.subr.mxu0 0.0
    %168 = vmatpush1.msra.mxu0 0.0
    %169 = vmatprep.subr.mxu0 0.0
    %170 = vmatpush1.msra.mxu0 0.0
    %171 = vmatprep.subr.mxu0 0.0
    %172 = vmatpush1.msra.mxu0 0.0
    %173 = vmatprep.subr.mxu0 0.0
    %174 = vmatpush1.msra.mxu0 0.0
    %175 = vmatprep.subr.mxu0 0.0
    %176 = vmatpush1.msra.mxu0 0.0
    %177 = vmatprep.subr.mxu0 0.0
    %178 = vmatpush1.msra.mxu0 0.0
    %179 = vmatprep.subr.mxu0 0.0
    %180 = vmatpush1.msra.mxu0 0.0
    %181 = vmatprep.subr.mxu0 0.0
    %182 = vmatpush1.msra.mxu0 0.0
    %183 = vmatprep.subr.mxu0 0.0
    %184 = vmatpush1.msra.mxu0 0.0
    %185 = vmatprep.subr.mxu0 0.0
    %186 = vmatpush1.msra.mxu0 0.0
    %187 = vmatprep.subr.mxu0 0.0
    %188 = vmatpush1.msra.mxu0 0.0
    %189 = vmatprep.subr.mxu0 0.0
    %190 = vmatpush1.msra.mxu0 0.0
    %191 = vmatprep.mubr.f32.mxu0 0.0
    %192 = vmatmul.mubr.f32.gmra.mrb[0].mxu0 %v122
    %v193 = vpop.f32.mrb[0].mxu0
    %v194 = vadd.f32 0.0, %v193
    %v195 = vpop.f32.mrb[0].mxu0
    %196 = vmatprep.mubr.f32.mxu0 0.0
    %197 = vmatmul.mubr.f32.gmra.mrb[0].mxu0 %v125
    %v198 = vpop.f32.mrb[0].mxu0
    %v199 = vadd.f32 0.0, %v198
    %v200 = vpop.f32.mrb[0].mxu0
    %201 = vdwg.mxu0
    %202 = vst.msk [vmem:[#allocation10] sm:$0xff] %vm71, %v194
    %203 = vst.msk [vmem:[#allocation10 + $0x8] sm:$0xff] %vm71, %v199
    // Predicated region
    $region34: #{tpu_custom_call.1} parent=1 // pred_check
      _
    $region35: #{tpu_custom_call.1} parent=1 // pred_check_branch
      %205 = sbr.rel (0) target = $region37
    $region36: #{tpu_custom_call.1} parent=1 // pred_region
      %s207 = ssub.s32 256, 256
      %208 = vsyncadd [#allocation4], %s207
      %s209 = sshll.u32 [#allocation10], 4
      %s210 = int_to_ptr.vmem [resolvable:$true] %s209
      %215 = dma.vmem_to_hbm [thread:$0]  %s210, 256, %s4, [#allocation4], 128, 128, 8
    $region37: #{tpu_custom_call.1} parent=1 // pred_fallthru
      _
    // Predicated region
    $region38: #{tpu_custom_call.1} parent=1 // pred_check
      _
    $region39: #{tpu_custom_call.1} parent=1 // pred_check_branch
      %217 = sbr.rel (0) target = $region41
    $region40: #{tpu_custom_call.1} parent=1 // pred_region
      %218 = dma.done [#allocation4], 256
    $region41: #{tpu_custom_call.1} parent=1 // pred_fallthru
      _
    %219 = vsyncpa [#allocation3], 1
    %220 = vsyncpa [#allocation6], 1
    %221 = vsyncpa [#allocation9], 1
    %222 = vsyncpa [#allocation4], 1

</llo_original>
